<compile_context>
chip_gen: v7x
topology: tpu7x:2x2x1
jax: 0.10.0
libtpu: 0.0.40
codegen_flags: <defaults>
</compile_context>

<pallas_src>
import functools
import itertools
import random

import jax
import jax.numpy as jnp
import numpy as np
from jax.experimental import pallas as pl
from jax.experimental.pallas import tpu as pltpu


# ----------------------------- Pallas kernel ------------------------------

def _laser_fused_kernel(x_ref, w1_ref, b1_ref, w2_ref, b2_ref, o_ref):
    # E = relu(x @ W1_blockdiag + b1)   (B, N*H), f32 accumulation, stays in vregs
    e = jnp.dot(x_ref[...], w1_ref[...], preferred_element_type=jnp.float32)
    e = jnp.maximum(e + b1_ref[...], 0.0)
    # O = E @ W2_maskfolded + b2        (B, P), bf16 operands / f32 accumulation
    o_ref[...] = (jnp.dot(e.astype(jnp.bfloat16), w2_ref[...],
                          preferred_element_type=jnp.float32)
                  + b2_ref[...]).astype(o_ref.dtype)


@jax.jit
def laser_fused_forward(x, w1, b1, w2, b2):
    B = x.shape[0]
    P = w2.shape[1]                       # padded output columns (multiple of 128)
    return pl.pallas_call(
        _laser_fused_kernel,
        out_shape=jax.ShapeDtypeStruct((B, P), jnp.float32),
        grid=(1,),                        # single step: extractor computed once
        in_specs=[
            pl.BlockSpec(x.shape, lambda i: (0, 0)),    # full x    (bf16)
            pl.BlockSpec(w1.shape, lambda i: (0, 0)),   # full W1   (bf16)
            pl.BlockSpec(b1.shape, lambda i: (0, 0)),   # full b1   (f32)
            pl.BlockSpec(w2.shape, lambda i: (0, 0)),   # full W2   (bf16)
            pl.BlockSpec(b2.shape, lambda i: (0, 0)),   # full b2   (f32)
        ],
        out_specs=pl.BlockSpec((B, P), lambda i: (0, 0)),
        compiler_params=pltpu.CompilerParams(
            dimension_semantics=("arbitrary",),   # do not core-split this tiny kernel
            vmem_limit_bytes=32 * 1024 * 1024),
    )(x, w1, b1, w2, b2)


# ----------------------------- Model wrapper ------------------------------

def powerset_except_empty(num_clients):
    elems = list(range(num_clients))
    return [s for r in range(1, num_clients + 1)
            for s in itertools.combinations(elems, r)]


class BaseLaserModelPallas:
    LANE = 128  # pad output columns to a lane multiple (unmasked stores)

    def __init__(self, num_clients, block_dim, hidden, num_classes, key):
        self.num_clients = num_clients
        self.block_dim = block_dim
        self.hidden = hidden
        self.num_classes = num_classes
        self.powerset = powerset_except_empty(num_clients)
        self.subset_index = {s: idx for idx, s in enumerate(self.powerset)}

        # ---- per-module parameters (deterministic synthetic "checkpoint") ----
        keys = jax.random.split(key, 4 * num_clients)
        self.fe_w, self.fe_b, self.fu_w, self.fu_b = [], [], [], []
        for i in range(num_clients):
            k0, k1, k2, k3 = keys[4 * i:4 * i + 4]
            self.fe_w.append(jax.random.normal(k0, (block_dim, hidden), jnp.float32) * 0.05)
            self.fe_b.append(jax.random.normal(k1, (1, hidden), jnp.float32) * 0.05)
            self.fu_w.append(jax.random.normal(k2, (hidden, num_classes), jnp.float32) * 0.05)
            self.fu_b.append(jax.random.normal(k3, (1, num_classes), jnp.float32) * 0.05)

        # ---- pack parameters into the fused layout (host-side, once) ----
        N, D, H, C = num_clients, block_dim, hidden, num_classes
        S = len(self.powerset)

        # Block-diagonal extractor weight and concatenated bias.
        # (Kept block-diagonal at these toy shapes; see header note for scaling.)
        w1 = jnp.zeros((N * D, N * H), jnp.float32)
        for n in range(N):
            w1 = w1.at[n * D:(n + 1) * D, n * H:(n + 1) * H].set(self.fe_w[n])
        b1 = jnp.concatenate([b.reshape(1, H) for b in self.fe_b], axis=1)   # (1, N*H)

        # Normalized membership mask: mask[s, n] = 1/|S_s| if n in subset s else 0.
        mask = np.zeros((S, N), np.float32)
        for s_idx, subset in enumerate(self.powerset):
            mask[s_idx, list(subset)] = 1.0 / len(subset)
        mask = jnp.asarray(mask)

        # Big fusion weight: column block (s, i) = stack_n( mask[s, n] * fu_w[i] ).
        # Linearity: mean-then-linear == weighted sum of per-client products.
        fu_w_stacked = jnp.stack(self.fu_w, axis=0)                          # (N, H, C)
        fu_b_stacked = jnp.stack([b.reshape(C) for b in self.fu_b], axis=0)  # (N, C)
        w2 = jnp.einsum("sn,ihc->nhsic", mask, fu_w_stacked).reshape(N * H, S * N * C)
        b2 = jnp.broadcast_to(fu_b_stacked[None], (S, N, C)).reshape(1, S * N * C)

        # Pad output columns to a lane multiple; bf16 MXU operands, f32 biases.
        self.total_cols = S * N * C
        padded = pl.cdiv(self.total_cols, self.LANE) * self.LANE
        self.w1 = w1.astype(jnp.bfloat16)
        self.b1 = b1                                             # f32
        self.w2 = jnp.pad(w2, ((0, 0), (0, padded - self.total_cols))).astype(jnp.bfloat16)
        self.b2 = jnp.pad(b2, ((0, 0), (0, padded - self.total_cols)))       # f32

    # Concrete get_block: vertical split along the feature axis.
    def get_block(self, x, i):
        return x[:, i * self.block_dim:(i + 1) * self.block_dim]

    def _dense_outputs(self, x):
        """(B, padded) slab; columns (s, i) hold mean_{j in S_s}(emb_j) @ fu_w[i] + fu_b[i]."""
        return laser_fused_forward(x.astype(jnp.bfloat16),
                                   self.w1, self.b1, self.w2, self.b2)

    def _slice(self, dense, subset, head):
        col = (self.subset_index[subset] * self.num_clients + head) * self.num_classes
        return dense[:, col:col + self.num_classes]

    def forward(self, x, training=True, observed_blocks=None):
        if observed_blocks is None:
            observed_blocks = list(range(self.num_clients))

        dense = self._dense_outputs(x)   # single Pallas launch for the whole forward

        if training:
            outputs = []
            for i in range(self.num_clients):
                if i not in observed_blocks:
                    continue
                sets_considered_by_head = [
                    clients_l for clients_l in self.powerset
                    if i in clients_l and set(clients_l).issubset(set(observed_blocks))
                ]
                head_output = {}
                for num_clients_in_agg in range(1, len(observed_blocks) + 1):
                    set_to_sample = [cs for cs in sets_considered_by_head
                                     if len(cs) == num_clients_in_agg]
                    # Host-side random subset selection (mirrors torch random.sample).
                    [sample] = random.sample(set_to_sample, 1)
                    head_output[sample] = self._slice(dense, sample, i)
                outputs.append(head_output)
        else:
            # Mirrors the torch eval branch (full powerset per head).
            outputs = [
                {clients_l: self._slice(dense, clients_l, i)
                 for clients_l in self.powerset if i in clients_l}
                for i in range(self.num_clients)
            ]
        return outputs


# --------------------------------- Main -----------------------------------

if __name__ == "__main__":
    random.seed(0)  # deterministic subset sampling in training mode

    num_clients, block_dim, hidden, num_classes, batch = 4, 16, 32, 8, 8

    key = jax.random.PRNGKey(0)
    k_param, k_x = jax.random.split(key)
    model = BaseLaserModelPallas(num_clients, block_dim, hidden, num_classes, k_param)
    x = jax.random.normal(k_x, (batch, num_clients * block_dim), jnp.float32)

    train_outputs = model.forward(x, training=True)    # one fused kernel launch
    eval_outputs = model.forward(x, training=False)    # one fused kernel launch

    leaves = []
    for head in train_outputs + eval_outputs:
        leaves.extend(head.values())
    for leaf in leaves:
        jax.block_until_ready(leaf)

    # ------------------ float64 numpy reference check ------------------
    # bf16 MXU operands => looser tolerance than the previous f32 version.
    RTOL, ATOL = 2e-2, 5e-3

    x_np = np.asarray(x, np.float64)
    fe_w = [np.asarray(w, np.float64) for w in model.fe_w]
    fe_b = [np.asarray(b, np.float64) for b in model.fe_b]
    fu_w = [np.asarray(w, np.float64) for w in model.fu_w]
    fu_b = [np.asarray(b, np.float64) for b in model.fu_b]
    embs = [np.maximum(x_np[:, n * block_dim:(n + 1) * block_dim] @ fe_w[n] + fe_b[n], 0.0)
            for n in range(num_clients)]

    def ref_out(subset, head):
        m = np.mean(np.stack([embs[j] for j in subset], 0), axis=0)
        return m @ fu_w[head] + fu_b[head]

    for i, head in enumerate(eval_outputs):
        for subset, out in head.items():
            assert out.shape == (batch, num_classes), (subset, out.shape)
            np.testing.assert_allclose(np.asarray(out), ref_out(subset, i),
                                       rtol=RTOL, atol=ATOL)
    for head_idx, head in enumerate(train_outputs):
        for subset, out in head.items():
            assert out.shape == (batch, num_classes), (subset, out.shape)
            assert head_idx in subset
            np.testing.assert_allclose(np.asarray(out), ref_out(subset, head_idx),
                                       rtol=RTOL, atol=ATOL)

    print("KERNEL_OK")
</pallas_src>

<mosaic_0001>
module attributes {stable_mosaic.version = 11 : i64} {
  func.func @_laser_fused_kernel(%arg0: i32, %arg1: memref<8x64xbf16, #tpu.memory_space<vmem>>, %arg2: memref<64x128xbf16, #tpu.memory_space<vmem>>, %arg3: memref<1x128xf32, #tpu.memory_space<vmem>>, %arg4: memref<128x512xbf16, #tpu.memory_space<vmem>>, %arg5: memref<1x512xf32, #tpu.memory_space<vmem>>, %arg6: memref<8x512xf32, #tpu.memory_space<vmem>>) attributes {dimension_semantics = [#tpu.dimension_semantics<arbitrary>], iteration_bounds = array<i64: 1>, scalar_prefetch = 0 : i64, scratch_operands = 0 : i64, tpu.core_type = #tpu.core_type<tc>, window_params = [{pipeline_mode = #tpu.pipeline_mode<synchronous>, transform_indices = @transform_0, window_bounds = array<i64: 8, 64>}, {pipeline_mode = #tpu.pipeline_mode<synchronous>, transform_indices = @transform_1, window_bounds = array<i64: 64, 128>}, {pipeline_mode = #tpu.pipeline_mode<synchronous>, transform_indices = @transform_2, window_bounds = array<i64: 1, 128>}, {pipeline_mode = #tpu.pipeline_mode<synchronous>, transform_indices = @transform_3, window_bounds = array<i64: 128, 512>}, {pipeline_mode = #tpu.pipeline_mode<synchronous>, transform_indices = @transform_4, window_bounds = array<i64: 1, 512>}, {pipeline_mode = #tpu.pipeline_mode<synchronous>, transform_indices = @transform_5, window_bounds = array<i64: 8, 512>}]} {
    %c0 = arith.constant 0 : index
    %c0_0 = arith.constant 0 : index
    %0 = vector.load %arg1[%c0, %c0_0] : memref<8x64xbf16, #tpu.memory_space<vmem>>, vector<8x64xbf16>
    %c0_1 = arith.constant 0 : index
    %c0_2 = arith.constant 0 : index
    %1 = vector.load %arg2[%c0_1, %c0_2] : memref<64x128xbf16, #tpu.memory_space<vmem>>, vector<64x128xbf16>
    %cst = arith.constant dense<0.000000e+00> : vector<8x128xf32>
    %2 = tpu.matmul %0, %1, %cst {dimension_numbers = #tpu.dot_dimension_numbers<[1], [0], [0], [1], [0, 0, 1, 1], [], []>} : vector<8x64xbf16>, vector<64x128xbf16>, vector<8x128xf32> -> vector<8x128xf32>
    %c0_3 = arith.constant 0 : index
    %c0_4 = arith.constant 0 : index
    %3 = vector.load %arg3[%c0_3, %c0_4] : memref<1x128xf32, #tpu.memory_space<vmem>>, vector<1x128xf32>
    %4 = vector.broadcast %3 : vector<1x128xf32> to vector<8x128xf32>
    %5 = arith.addf %2, %4 : vector<8x128xf32>
    %cst_5 = arith.constant 0.000000e+00 : f32
    %6 = vector.broadcast %cst_5 : f32 to vector<8x128xf32>
    %7 = arith.maximumf %5, %6 : vector<8x128xf32>
    %8 = arith.truncf %7 : vector<8x128xf32> to vector<8x128xbf16>
    %c0_6 = arith.constant 0 : index
    %c0_7 = arith.constant 0 : index
    %9 = vector.load %arg4[%c0_6, %c0_7] : memref<128x512xbf16, #tpu.memory_space<vmem>>, vector<128x512xbf16>
    %cst_8 = arith.constant dense<0.000000e+00> : vector<8x512xf32>
    %10 = tpu.matmul %8, %9, %cst_8 {dimension_numbers = #tpu.dot_dimension_numbers<[1], [0], [0], [1], [0, 0, 1, 1], [], []>} : vector<8x128xbf16>, vector<128x512xbf16>, vector<8x512xf32> -> vector<8x512xf32>
    %c0_9 = arith.constant 0 : index
    %c0_10 = arith.constant 0 : index
    %11 = vector.load %arg5[%c0_9, %c0_10] : memref<1x512xf32, #tpu.memory_space<vmem>>, vector<1x512xf32>
    %12 = vector.broadcast %11 : vector<1x512xf32> to vector<8x512xf32>
    %13 = arith.addf %10, %12 : vector<8x512xf32>
    %c0_11 = arith.constant 0 : index
    %c0_12 = arith.constant 0 : index
    %14 = vector.load %arg6[%c0_11, %c0_12] : memref<8x512xf32, #tpu.memory_space<vmem>>, vector<8x512xf32>
    tpu.vector_store %arg6[%c0_11, %c0_12], %13 {strides = array<i32>} : memref<8x512xf32, #tpu.memory_space<vmem>>, vector<8x512xf32>,
    return
  }
  func.func @transform_0(%arg0: i32) -> (i32, i32) {
    %c0_i32 = arith.constant 0 : i32
    %c0_i32_0 = arith.constant 0 : i32
    %c0_i32_1 = arith.constant 0 : i32
    return %c0_i32, %c0_i32_0 : i32, i32
  }
  func.func @transform_1(%arg0: i32) -> (i32, i32) {
    %c0_i32 = arith.constant 0 : i32
    %c0_i32_0 = arith.constant 0 : i32
    %c0_i32_1 = arith.constant 0 : i32
    return %c0_i32, %c0_i32_0 : i32, i32
  }
  func.func @transform_2(%arg0: i32) -> (i32, i32) {
    %c0_i32 = arith.constant 0 : i32
    %c0_i32_0 = arith.constant 0 : i32
    %c0_i32_1 = arith.constant 0 : i32
    return %c0_i32, %c0_i32_0 : i32, i32
  }
  func.func @transform_3(%arg0: i32) -> (i32, i32) {
    %c0_i32 = arith.constant 0 : i32
    %c0_i32_0 = arith.constant 0 : i32
    %c0_i32_1 = arith.constant 0 : i32
    return %c0_i32, %c0_i32_0 : i32, i32
  }
  func.func @transform_4(%arg0: i32) -> (i32, i32) {
    %c0_i32 = arith.constant 0 : i32
    %c0_i32_0 = arith.constant 0 : i32
    %c0_i32_1 = arith.constant 0 : i32
    return %c0_i32, %c0_i32_0 : i32, i32
  }
  func.func @transform_5(%arg0: i32) -> (i32, i32) {
    %c0_i32 = arith.constant 0 : i32
    %c0_i32_0 = arith.constant 0 : i32
    %c0_i32_1 = arith.constant 0 : i32
    return %c0_i32, %c0_i32_0 : i32, i32
  }
}

</mosaic_0001>

<llo_original>
// kernel: laser_fused_forward.1
$region0: #{laser_fused_forward.1}
  #allocation0 [shape = 'u32[]', space=smem, size = 0x4, offset = 0x4, fixed_abs, tag = 'smem constant byte address 0x4 - core index']
  #allocation1 [shape = 'u32[144,128]{1,0:T(1,128)}', space=vmem, size = 0x12000, scoped, tag = 'internal scratch']
  %s0 = inlined_call_operand.hbm [shape: bf16[8,64], index: 0, kind: input, shape index: {}]
  %s1 = inlined_call_operand.hbm [shape: bf16[64,128], index: 1, kind: input, shape index: {}]
  %s2 = inlined_call_operand.vmem [shape: f32[1,128], index: 2, kind: input, shape index: {}]
  %s3 = inlined_call_operand.hbm [shape: bf16[128,512], index: 3, kind: input, shape index: {}]
  %s4 = inlined_call_operand.vmem [shape: f32[1,512], index: 4, kind: input, shape index: {}]
  %s5 = inlined_call_operand.hbm [shape: f32[8,512], index: 5, kind: output, shape index: {}]
  %s6 = sld [smem:[#allocation0]]
  $region42: #{laser_fused_forward.1} parent=0
    _
  %s8 = ssub.s32 1, %s6
  %s9 = scalar_select 0, %s8, %s6
  $region1: #{laser_fused_forward.1} parent=0
    #allocation2 [shape = 'u8[2048]{0}', space=vmem, size = 0x800, scoped, tag = 'input window, operand 0, single buffered']
    #allocation3 [shape = 's32[1]{0}', space=sflag, size = 0x4, scoped, tag = 'scoped memory for laser_fused_forward.1']
    #allocation4 [shape = 's32[1]{0}', space=sflag, size = 0x4, scoped, tag = 'scoped memory for laser_fused_forward.1']
    #allocation5 [shape = 'u8[16384]{0}', space=vmem, size = 0x4000, scoped, tag = 'input window, operand 1, single buffered']
    #allocation6 [shape = 's32[1]{0}', space=sflag, size = 0x4, scoped, tag = 'scoped memory for laser_fused_forward.1']
    #allocation7 [shape = 'u8[131072]{0}', space=vmem, size = 0x20000, scoped, tag = 'input window, operand 3, single buffered']
    #allocation8 [shape = 'u8[16384]{0}', space=vmem, size = 0x4000, scoped, tag = 'output window, operand 0, single buffered']
    %10 = vsyncpa [#allocation3], 0
    %11 = vsyncpa [#allocation6], 0
    %12 = vsyncpa [#allocation4], 0
    // Predicated region
    $region2: #{laser_fused_forward.1} parent=1 // pred_check
      _
    $region3: #{laser_fused_forward.1} parent=1 // pred_check_branch
      %14 = sbr.rel (0) target = $region5
    $region4: #{laser_fused_forward.1} parent=1 // pred_region
      %s16 = ssub.s32 64, 64
      %17 = vsyncadd [#allocation3], %s16
      %s19 = sshll.u32 [#allocation2], 4
      %s20 = int_to_ptr.vmem [resolvable:$true] %s19
      %22 = dma.hbm_to_vmem [thread:$0]  %s0, 64, %s20, [#allocation3]
    $region5: #{laser_fused_forward.1} parent=1 // pred_fallthru
      _
    // Predicated region
    $region6: #{laser_fused_forward.1} parent=1 // pred_check
      _
    $region7: #{laser_fused_forward.1} parent=1 // pred_check_branch
      %24 = sbr.rel (0) target = $region9
    $region8: #{laser_fused_forward.1} parent=1 // pred_region
      %s26 = ssub.s32 512, 512
      %27 = vsyncadd [#allocation6], %s26
      %s28 = sshll.u32 [#allocation5], 4
      %s29 = int_to_ptr.vmem [resolvable:$true] %s28
      %34 = dma.hbm_to_vmem [thread:$0]  %s1, 512, %s29, [#allocation6], 64, 64, 4
    $region9: #{laser_fused_forward.1} parent=1 // pred_fallthru
      _
    // Predicated region
    $region10: #{laser_fused_forward.1} parent=1 // pred_check
      _
    $region11: #{laser_fused_forward.1} parent=1 // pred_check_branch
      %36 = sbr.rel (0) target = $region13
    $region12: #{laser_fused_forward.1} parent=1 // pred_region
      _
    $region13: #{laser_fused_forward.1} parent=1 // pred_fallthru
      _
    // Predicated region
    $region14: #{laser_fused_forward.1} parent=1 // pred_check
      _
    $region15: #{laser_fused_forward.1} parent=1 // pred_check_branch
      %38 = sbr.rel (0) target = $region17
    $region16: #{laser_fused_forward.1} parent=1 // pred_region
      %s40 = ssub.s32 4096, 4096
      %41 = vsyncadd [#allocation6], %s40
      %s42 = sshll.u32 [#allocation7], 4
      %s43 = int_to_ptr.vmem [resolvable:$true] %s42
      %48 = dma.hbm_to_vmem [thread:$0]  %s3, 4096, %s43, [#allocation6], 256, 256, 16
    $region17: #{laser_fused_forward.1} parent=1 // pred_fallthru
      _
    // Predicated region
    $region18: #{laser_fused_forward.1} parent=1 // pred_check
      _
    $region19: #{laser_fused_forward.1} parent=1 // pred_check_branch
      %50 = sbr.rel (0) target = $region21
    $region20: #{laser_fused_forward.1} parent=1 // pred_region
      _
    $region21: #{laser_fused_forward.1} parent=1 // pred_fallthru
      _
    // Predicated region
    $region22: #{laser_fused_forward.1} parent=1 // pred_check
      _
    $region23: #{laser_fused_forward.1} parent=1 // pred_check_branch
      %52 = sbr.rel (0) target = $region25
    $region24: #{laser_fused_forward.1} parent=1 // pred_region
      %53 = dma.done [#allocation3], 64
    $region25: #{laser_fused_forward.1} parent=1 // pred_fallthru
      _
    // Predicated region
    $region26: #{laser_fused_forward.1} parent=1 // pred_check
      _
    $region27: #{laser_fused_forward.1} parent=1 // pred_check_branch
      %55 = sbr.rel (0) target = $region29
    $region28: #{laser_fused_forward.1} parent=1 // pred_region
      %56 = dma.done [#allocation6], 512
    $region29: #{laser_fused_forward.1} parent=1 // pred_fallthru
      _
    // Predicated region
    $region30: #{laser_fused_forward.1} parent=1 // pred_check
      _
    $region31: #{laser_fused_forward.1} parent=1 // pred_check_branch
      %58 = sbr.rel (0) target = $region33
    $region32: #{laser_fused_forward.1} parent=1 // pred_region
      %59 = dma.done [#allocation6], 4096
    $region33: #{laser_fused_forward.1} parent=1 // pred_fallthru
      _
    %v61 = vld [vmem:[#allocation2] sm:$0xf]
    %v62 = vld [vmem:[#allocation5] sm:$0xf]
    %v63 = vld [vmem:[#allocation5 + $0x4] sm:$0xf]
    %v64 = vld [vmem:[#allocation5 + $0x8] sm:$0xf]
    %v65 = vld [vmem:[#allocation5 + $0xc] sm:$0xf]
    %v66 = vld [vmem:[#allocation5 + $0x10] sm:$0xf]
    %v67 = vld [vmem:[#allocation5 + $0x14] sm:$0xf]
    %v68 = vld [vmem:[#allocation5 + $0x18] sm:$0xf]
    %v69 = vld [vmem:[#allocation5 + $0x1c] sm:$0xf]
    %v70 = vld [vmem:[%s2] sm:$0x1]
    %v72 = vlaneseq
    %v73 = vshrl.u32 %v72, 7
    %v74 = vsub.s32 0, %v73
    %v75 = vrot.slane %v70, %v74
    %v85 = vunpack.c.l.b16 %v62
    %v86 = vunpack.c.l.b16 %v63
    %v87 = vunpack.c.l.b16 %v64
    %v88 = vunpack.c.l.b16 %v65
    %v89 = vunpack.c.l.b16 %v66
    %v90 = vunpack.c.l.b16 %v67
    %v91 = vunpack.c.l.b16 %v68
    %v92 = vunpack.c.l.b16 %v69
    %v93 = vpack.c.b16 %v86, %v85
    %v94 = vpack.c.b16 %v88, %v87
    %v95 = vpack.c.b16 %v90, %v89
    %v96 = vpack.c.b16 %v92, %v91
    %vm101 = vcmask 523264
    %v103 = vsel %vm101, %v61, 0
    %105 = vmatprep.subr.bf16.mxu0 0
    %106 = vmatpush1.bf16.msra.mxu0 %v93
    %107 = vmatprep.subr.bf16.mxu0 0
    %108 = vmatpush1.bf16.msra.mxu0 %v94
    %109 = vmatprep.subr.bf16.mxu0 0
    %110 = vmatpush1.bf16.msra.mxu0 %v95
    %111 = vmatprep.subr.bf16.mxu0 0
    %112 = vmatpush1.bf16.msra.mxu0 %v96
    %113 = vmatprep.subr.bf16.mxu0 0
    %114 = vmatpush1.bf16.msra.mxu0 0
    %115 = vmatprep.subr.bf16.mxu0 0
    %116 = vmatpush1.bf16.msra.mxu0 0
    %117 = vmatprep.subr.bf16.mxu0 0
    %118 = vmatpush1.bf16.msra.mxu0 0
    %119 = vmatprep.subr.bf16.mxu0 0
    %120 = vmatpush1.bf16.msra.mxu0 0
    %121 = vmatprep.subr.bf16.mxu0 0
    %122 = vmatpush1.bf16.msra.mxu0 0
    %123 = vmatprep.subr.bf16.mxu0 0
    %124 = vmatpush1.bf16.msra.mxu0 0
    %125 = vmatprep.subr.bf16.mxu0 0
    %126 = vmatpush1.bf16.msra.mxu0 0
    %127 = vmatprep.subr.bf16.mxu0 0
    %128 = vmatpush1.bf16.msra.mxu0 0
    %129 = vmatprep.subr.bf16.mxu0 0
    %130 = vmatpush1.bf16.msra.mxu0 0
    %131 = vmatprep.subr.bf16.mxu0 0
    %132 = vmatpush1.bf16.msra.mxu0 0
    %133 = vmatprep.subr.bf16.mxu0 0
    %134 = vmatpush1.bf16.msra.mxu0 0
    %135 = vmatprep.subr.bf16.mxu0 0
    %136 = vmatpush1.bf16.msra.mxu0 0
    %137 = vmatprep.mubr.bf16.mxu0 0
    %138 = vmatmul.mubr.bf16.gmra.mrb[0].mxu0 %v103
    %v139 = vpop.f32.mrb[0].mxu0
    %v140 = vadd.f32 %v75, %v139
    %v141 = vpop.f32.mrb[0].mxu0
    %v142 = vpop.f32.mrb[0].mxu0
    %v143 = vpop.f32.mrb[0].mxu0
    %144 = vdwg.mxu0
    %v145 = vmax.f32 %v140, 0.0
    %v146 = vpack.c.bf16 %v145, %v145
    %v147 = vld [vmem:[#allocation7] sm:$0xff]
    %v148 = vld [vmem:[#allocation7 + $0x8] sm:$0xff]
    %v149 = vld [vmem:[#allocation7 + $0x10] sm:$0xff]
    %v150 = vld [vmem:[#allocation7 + $0x18] sm:$0xff]
    %v151 = vld [vmem:[#allocation7 + $0x20] sm:$0xff]
    %v152 = vld [vmem:[#allocation7 + $0x28] sm:$0xff]
    %v153 = vld [vmem:[#allocation7 + $0x30] sm:$0xff]
    %v154 = vld [vmem:[#allocation7 + $0x38] sm:$0xff]
    %v155 = vld [vmem:[#allocation7 + $0x40] sm:$0xff]
    %v156 = vld [vmem:[#allocation7 + $0x48] sm:$0xff]
    %v157 = vld [vmem:[#allocation7 + $0x50] sm:$0xff]
    %v158 = vld [vmem:[#allocation7 + $0x58] sm:$0xff]
    %v159 = vld [vmem:[#allocation7 + $0x60] sm:$0xff]
    %v160 = vld [vmem:[#allocation7 + $0x68] sm:$0xff]
    %v161 = vld [vmem:[#allocation7 + $0x70] sm:$0xff]
    %v162 = vld [vmem:[#allocation7 + $0x78] sm:$0xff]
    %v163 = vld [vmem:[#allocation7 + $0x80] sm:$0xff]
    %v164 = vld [vmem:[#allocation7 + $0x88] sm:$0xff]
    %v165 = vld [vmem:[#allocation7 + $0x90] sm:$0xff]
    %v166 = vld [vmem:[#allocation7 + $0x98] sm:$0xff]
    %v167 = vld [vmem:[#allocation7 + $0xa0] sm:$0xff]
    %v168 = vld [vmem:[#allocation7 + $0xa8] sm:$0xff]
    %v169 = vld [vmem:[#allocation7 + $0xb0] sm:$0xff]
    %v170 = vld [vmem:[#allocation7 + $0xb8] sm:$0xff]
    %v171 = vld [vmem:[#allocation7 + $0xc0] sm:$0xff]
    %v172 = vld [vmem:[#allocation7 + $0xc8] sm:$0xff]
    %v173 = vld [vmem:[#allocation7 + $0xd0] sm:$0xff]
    %v174 = vld [vmem:[#allocation7 + $0xd8] sm:$0xff]
    %v175 = vld [vmem:[#allocation7 + $0xe0] sm:$0xff]
    %v176 = vld [vmem:[#allocation7 + $0xe8] sm:$0xff]
    %v177 = vld [vmem:[#allocation7 + $0xf0] sm:$0xff]
    %v178 = vld [vmem:[#allocation7 + $0xf8] sm:$0xff]
    %v179 = vld [vmem:[%s4] sm:$0xf]
    %v181 = vlaneseq
    %v182 = vshrl.u32 %v181, 7
    %v183 = vsub.s32 0, %v182
    %v184 = vrot.slane %v179, %v183
    %v185 = vlaneseq
    %v186 = vshrl.u32 %v185, 7
    %v187 = vsub.s32 1, %v186
    %v188 = vrot.slane %v179, %v187
    %v189 = vlaneseq
    %v190 = vshrl.u32 %v189, 7
    %v191 = vsub.s32 2, %v190
    %v192 = vrot.slane %v179, %v191
    %v193 = vlaneseq
    %v194 = vshrl.u32 %v193, 7
    %v195 = vsub.s32 3, %v194
    %v196 = vrot.slane %v179, %v195
    %v233 = vunpack.c.l.b16 %v147
    %v234 = vunpack.c.h.b16 %v147
    %v235 = vunpack.c.l.b16 %v148
    %v236 = vunpack.c.h.b16 %v148
    %v237 = vunpack.c.l.b16 %v149
    %v238 = vunpack.c.h.b16 %v149
    %v239 = vunpack.c.l.b16 %v150
    %v240 = vunpack.c.h.b16 %v150
    %v241 = vunpack.c.l.b16 %v151
    %v242 = vunpack.c.h.b16 %v151
    %v243 = vunpack.c.l.b16 %v152
    %v244 = vunpack.c.h.b16 %v152
    %v245 = vunpack.c.l.b16 %v153
    %v246 = vunpack.c.h.b16 %v153
    %v247 = vunpack.c.l.b16 %v154
    %v248 = vunpack.c.h.b16 %v154
    %v249 = vunpack.c.l.b16 %v155
    %v250 = vunpack.c.h.b16 %v155
    %v251 = vunpack.c.l.b16 %v156
    %v252 = vunpack.c.h.b16 %v156
    %v253 = vunpack.c.l.b16 %v157
    %v254 = vunpack.c.h.b16 %v157
    %v255 = vunpack.c.l.b16 %v158
    %v256 = vunpack.c.h.b16 %v158
    %v257 = vunpack.c.l.b16 %v159
    %v258 = vunpack.c.h.b16 %v159
    %v259 = vunpack.c.l.b16 %v160
    %v260 = vunpack.c.h.b16 %v160
    %v261 = vunpack.c.l.b16 %v161
    %v262 = vunpack.c.h.b16 %v161
    %v263 = vunpack.c.l.b16 %v162
    %v264 = vunpack.c.h.b16 %v162
    %v265 = vunpack.c.l.b16 %v163
    %v266 = vunpack.c.h.b16 %v163
    %v267 = vunpack.c.l.b16 %v164
    %v268 = vunpack.c.h.b16 %v164
    %v269 = vunpack.c.l.b16 %v165
    %v270 = vunpack.c.h.b16 %v165
    %v271 = vunpack.c.l.b16 %v166
    %v272 = vunpack.c.h.b16 %v166
    %v273 = vunpack.c.l.b16 %v167
    %v274 = vunpack.c.h.b16 %v167
    %v275 = vunpack.c.l.b16 %v168
    %v276 = vunpack.c.h.b16 %v168
    %v277 = vunpack.c.l.b16 %v169
    %v278 = vunpack.c.h.b16 %v169
    %v279 = vunpack.c.l.b16 %v170
    %v280 = vunpack.c.h.b16 %v170
    %v281 = vunpack.c.l.b16 %v171
    %v282 = vunpack.c.h.b16 %v171
    %v283 = vunpack.c.l.b16 %v172
    %v284 = vunpack.c.h.b16 %v172
    %v285 = vunpack.c.l.b16 %v173
    %v286 = vunpack.c.h.b16 %v173
    %v287 = vunpack.c.l.b16 %v174
    %v288 = vunpack.c.h.b16 %v174
    %v289 = vunpack.c.l.b16 %v175
    %v290 = vunpack.c.h.b16 %v175
    %v291 = vunpack.c.l.b16 %v176
    %v292 = vunpack.c.h.b16 %v176
    %v293 = vunpack.c.l.b16 %v177
    %v294 = vunpack.c.h.b16 %v177
    %v295 = vunpack.c.l.b16 %v178
    %v296 = vunpack.c.h.b16 %v178
    %v297 = vpack.c.b16 %v237, %v233
    %v298 = vpack.c.b16 %v238, %v234
    %v299 = vpack.c.b16 %v239, %v235
    %v300 = vpack.c.b16 %v240, %v236
    %v301 = vpack.c.b16 %v245, %v241
    %v302 = vpack.c.b16 %v246, %v242
    %v303 = vpack.c.b16 %v247, %v243
    %v304 = vpack.c.b16 %v248, %v244
    %v305 = vpack.c.b16 %v253, %v249
    %v306 = vpack.c.b16 %v254, %v250
    %v307 = vpack.c.b16 %v255, %v251
    %v308 = vpack.c.b16 %v256, %v252
    %v309 = vpack.c.b16 %v261, %v257
    %v310 = vpack.c.b16 %v262, %v258
    %v311 = vpack.c.b16 %v263, %v259
    %v312 = vpack.c.b16 %v264, %v260
    %v313 = vpack.c.b16 %v269, %v265
    %v314 = vpack.c.b16 %v270, %v266
    %v315 = vpack.c.b16 %v271, %v267
    %v316 = vpack.c.b16 %v272, %v268
    %v317 = vpack.c.b16 %v277, %v273
    %v318 = vpack.c.b16 %v278, %v274
    %v319 = vpack.c.b16 %v279, %v275
    %v320 = vpack.c.b16 %v280, %v276
    %v321 = vpack.c.b16 %v285, %v281
    %v322 = vpack.c.b16 %v286, %v282
    %v323 = vpack.c.b16 %v287, %v283
    %v324 = vpack.c.b16 %v288, %v284
    %v325 = vpack.c.b16 %v293, %v289
    %v326 = vpack.c.b16 %v294, %v290
    %v327 = vpack.c.b16 %v295, %v291
    %v328 = vpack.c.b16 %v296, %v292
    %361 = vmatprep.subr.bf16.mxu0 %v298
    %362 = vmatpush1.bf16.msra.mxu0 %v297
    %363 = vmatprep.subr.bf16.mxu0 %v302
    %364 = vmatpush1.bf16.msra.mxu0 %v301
    %365 = vmatprep.subr.bf16.mxu0 %v306
    %366 = vmatpush1.bf16.msra.mxu0 %v305
    %367 = vmatprep.subr.bf16.mxu0 %v310
    %368 = vmatpush1.bf16.msra.mxu0 %v309
    %369 = vmatprep.subr.bf16.mxu0 %v314
    %370 = vmatpush1.bf16.msra.mxu0 %v313
    %371 = vmatprep.subr.bf16.mxu0 %v318
    %372 = vmatpush1.bf16.msra.mxu0 %v317
    %373 = vmatprep.subr.bf16.mxu0 %v322
    %374 = vmatpush1.bf16.msra.mxu0 %v321
    %375 = vmatprep.subr.bf16.mxu0 %v326
    %376 = vmatpush1.bf16.msra.mxu0 %v325
    %377 = vmatprep.subr.bf16.mxu0 0
    %378 = vmatpush1.bf16.msra.mxu0 0
    %379 = vmatprep.subr.bf16.mxu0 0
    %380 = vmatpush1.bf16.msra.mxu0 0
    %381 = vmatprep.subr.bf16.mxu0 0
    %382 = vmatpush1.bf16.msra.mxu0 0
    %383 = vmatprep.subr.bf16.mxu0 0
    %384 = vmatpush1.bf16.msra.mxu0 0
    %385 = vmatprep.subr.bf16.mxu0 0
    %386 = vmatpush1.bf16.msra.mxu0 0
    %387 = vmatprep.subr.bf16.mxu0 0
    %388 = vmatpush1.bf16.msra.mxu0 0
    %389 = vmatprep.subr.bf16.mxu0 0
    %390 = vmatpush1.bf16.msra.mxu0 0
    %391 = vmatprep.subr.bf16.mxu0 0
    %392 = vmatpush1.bf16.msra.mxu0 0
    %393 = vmatprep.mubr.bf16.mxu0 0
    %394 = vmatmul.mubr.bf16.gmra.mrb[0].mxu0 %v146
    %v395 = vpop.f32.mrb[0].mxu0
    %v396 = vadd.f32 %v184, %v395
    %v397 = vpop.f32.mrb[0].mxu0
    %v398 = vadd.f32 %v188, %v397
    %v399 = vpop.f32.mrb[0].mxu0
    %v400 = vpop.f32.mrb[0].mxu0
    %401 = vdwg.mxu0
    %402 = vmatprep.subr.bf16.mxu0 %v300
    %403 = vmatpush1.bf16.msra.mxu0 %v299
    %404 = vmatprep.subr.bf16.mxu0 %v304
    %405 = vmatpush1.bf16.msra.mxu0 %v303
    %406 = vmatprep.subr.bf16.mxu0 %v308
    %407 = vmatpush1.bf16.msra.mxu0 %v307
    %408 = vmatprep.subr.bf16.mxu0 %v312
    %409 = vmatpush1.bf16.msra.mxu0 %v311
    %410 = vmatprep.subr.bf16.mxu0 %v316
    %411 = vmatpush1.bf16.msra.mxu0 %v315
    %412 = vmatprep.subr.bf16.mxu0 %v320
    %413 = vmatpush1.bf16.msra.mxu0 %v319
    %414 = vmatprep.subr.bf16.mxu0 %v324
    %415 = vmatpush1.bf16.msra.mxu0 %v323
    %416 = vmatprep.subr.bf16.mxu0 %v328
    %417 = vmatpush1.bf16.msra.mxu0 %v327
    %418 = vmatprep.subr.bf16.mxu0 0
    %419 = vmatpush1.bf16.msra.mxu0 0
    %420 = vmatprep.subr.bf16.mxu0 0
    %421 = vmatpush1.bf16.msra.mxu0 0
    %422 = vmatprep.subr.bf16.mxu0 0
    %423 = vmatpush1.bf16.msra.mxu0 0
    %424 = vmatprep.subr.bf16.mxu0 0
    %425 = vmatpush1.bf16.msra.mxu0 0
    %426 = vmatprep.subr.bf16.mxu0 0
    %427 = vmatpush1.bf16.msra.mxu0 0
    %428 = vmatprep.subr.bf16.mxu0 0
    %429 = vmatpush1.bf16.msra.mxu0 0
    %430 = vmatprep.subr.bf16.mxu0 0
    %431 = vmatpush1.bf16.msra.mxu0 0
    %432 = vmatprep.subr.bf16.mxu0 0
    %433 = vmatpush1.bf16.msra.mxu0 0
    %434 = vmatprep.mubr.bf16.mxu0 0
    %435 = vmatmul.mubr.bf16.gmra.mrb[0].mxu0 %v146
    %v436 = vpop.f32.mrb[0].mxu0
    %v437 = vadd.f32 %v192, %v436
    %v438 = vpop.f32.mrb[0].mxu0
    %v439 = vadd.f32 %v196, %v438
    %v440 = vpop.f32.mrb[0].mxu0
    %v441 = vpop.f32.mrb[0].mxu0
    %442 = vdwg.mxu0
    %443 = vst [vmem:[#allocation8] sm:$0xff] %v396
    %444 = vst [vmem:[#allocation8 + $0x8] sm:$0xff] %v398
    %445 = vst [vmem:[#allocation8 + $0x10] sm:$0xff] %v437
    %446 = vst [vmem:[#allocation8 + $0x18] sm:$0xff] %v439
    // Predicated region
    $region34: #{laser_fused_forward.1} parent=1 // pred_check
      _
    $region35: #{laser_fused_forward.1} parent=1 // pred_check_branch
      %448 = sbr.rel (0) target = $region37
    $region36: #{laser_fused_forward.1} parent=1 // pred_region
      %s450 = ssub.s32 512, 512
      %451 = vsyncadd [#allocation4], %s450
      %s453 = sshll.u32 [#allocation8], 4
      %s454 = int_to_ptr.vmem [resolvable:$true] %s453
      %456 = dma.vmem_to_hbm [thread:$0]  %s454, 512, %s5, [#allocation4]
    $region37: #{laser_fused_forward.1} parent=1 // pred_fallthru
      _
    // Predicated region
    $region38: #{laser_fused_forward.1} parent=1 // pred_check
      _
    $region39: #{laser_fused_forward.1} parent=1 // pred_check_branch
      %458 = sbr.rel (0) target = $region41
    $region40: #{laser_fused_forward.1} parent=1 // pred_region
      %459 = dma.done [#allocation4], 512
    $region41: #{laser_fused_forward.1} parent=1 // pred_fallthru
      _
    %460 = vsyncpa [#allocation3], 1
    %461 = vsyncpa [#allocation6], 1
    %462 = vsyncpa [#allocation4], 1

</llo_original>
